<compile_context>
chip_gen: v5e
topology: v5e:2x2
jax: 0.10.0
libtpu: 0.0.40
codegen_flags: <defaults>
</compile_context>

<pallas_src>
import re
import warnings

import numpy as np
import jax
import jax.numpy as jnp
from jax.experimental import pallas as pl
from jax.experimental.pallas import tpu as pltpu

_LANE = 128
_SUBLANE_BY_ITEMSIZE = {4: 8, 2: 16, 1: 32}   # dtype itemsize -> sublane packing
_COL_CANDIDATES = (4096, 2048, 1024, 512, 256, 128)
_VMEM_LIMIT_BYTES = 48 * 1024 * 1024          # safe on v5e/v6e (128 MiB) and v7x (64 MiB)


def _copy_kernel(x_ref, o_ref):
    # base(x) with base = Identity: straight pass-through of the tile.
    o_ref[...] = x_ref[...]


def _round_down(v, m):
    return (v // m) * m


def _round_up(v, m):
    return ((v + m - 1) // m) * m


def _tpu_generation() -> int:
    try:
        kind = jax.devices()[0].device_kind
    except Exception:
        return 0
    m = re.search(r"(\d+)", kind)
    return int(m.group(1)) if m else 0


_GEN = _tpu_generation()
# v7x: 2 TensorCores/chip, 64 MiB VMEM, ~3.2 TB/s HBM -> 8 MiB tiles amortize the
# ~0.35 us per-grid-step overhead.  v6e: 1 TC, 128 MiB VMEM -> also 8 MiB tiles.
# v5e / unknown: 1 TC, lower HBM BW and smaller scoped-VMEM default -> 4 MiB.
_NUM_TC = 2 if _GEN >= 7 else 1
_TARGET_TILE_BYTES = (8 if _GEN >= 6 else 4) * 1024 * 1024


def _choose_layout(n, itemsize):
    """Pick a lane-dense (rows, cols) view: cols % 128 == 0, rows * cols == n."""
    for c in _COL_CANDIDATES:
        if n % c == 0:
            return n // c, c
    return None  # n is not a multiple of 128


def _choose_tile_rows(rows, cols, itemsize, sublane):
    """Row-slab tile height: ~_TARGET_TILE_BYTES, sublane-aligned, ragged last
    block allowed (no exact-divisor requirement), balanced across TensorCores
    on multi-TC chips."""
    if rows <= sublane:
        return rows                                   # one full-extent block
    cap = max(sublane,
              _round_down(_TARGET_TILE_BYTES // (cols * itemsize), sublane))
    tile_r = min(cap, _round_up(rows, sublane))
    if tile_r >= rows:
        if _NUM_TC >= 2 and rows >= 2 * sublane:
            # Split one block into 2 balanced steps so both v7x TCs get work.
            return _round_up(pl.cdiv(rows, 2), sublane)
        return rows                                   # one full-extent block
    if _NUM_TC >= 2:
        # Keep the step count a multiple of the TC count and rebalance the tile
        # height so the ragged last block is not tiny (avoids a 2:1 TC skew).
        steps = _NUM_TC * pl.cdiv(pl.cdiv(rows, tile_r), _NUM_TC)
        tile_r = min(cap, _round_up(pl.cdiv(rows, steps), sublane))
    return tile_r


def _identity_mapping_impl(x: jax.Array) -> jax.Array:
    """Pallas implementation of IdentityMapping(base=Identity).forward."""
    orig_shape = x.shape
    n = int(x.size)
    if n == 0:
        return x
    itemsize = x.dtype.itemsize
    # TODO(synk): sub-byte dtypes (int4/fp4) report itemsize 1; their native
    #             sublane packing differs from int8's 32.
    sublane = _SUBLANE_BY_ITEMSIZE.get(itemsize, 8)

    flat = x.reshape(-1)                 # bitcast under jit (contiguous)
    n_pad = n
    layout = _choose_layout(n, itemsize)
    if layout is None:
        # Rare corner: element count not a multiple of 128.  Pad to the next
        # lane multiple (one extra HBM pass, only for odd sizes).
        # TODO(synk): copy the <128-element tail separately to avoid the pad.
        n_pad = _round_up(n, _LANE)
        flat = jnp.pad(flat, (0, n_pad - n))
        layout = _choose_layout(n_pad, itemsize)
    rows, cols = layout
    tile_r = _choose_tile_rows(rows, cols, itemsize, sublane)

    x2d = flat.reshape(rows, cols)
    block = pl.BlockSpec((tile_r, cols), lambda i: (i, 0))
    grid = (pl.cdiv(rows, tile_r),)      # ragged last block handled by Pallas

    y2d = pl.pallas_call(
        _copy_kernel,
        out_shape=jax.ShapeDtypeStruct((rows, cols), x.dtype),
        grid=grid,
        in_specs=[block],
        out_specs=block,
        # Pays off because the public entry point donates x (see jit below):
        # XLA can reuse the input HBM buffer for the output.
        input_output_aliases={0: 0},
        cost_estimate=pl.CostEstimate(
            flops=0, transcendentals=0, bytes_accessed=2 * n_pad * itemsize),
        compiler_params=pltpu.CompilerParams(
            dimension_semantics=("parallel",),
            vmem_limit_bytes=_VMEM_LIMIT_BYTES,
        ),
    )(x2d)

    y_flat = y2d.reshape(-1)
    if n_pad != n:
        y_flat = y_flat[:n]
    return y_flat.reshape(orig_shape)


# Public entry point: jitted with the input donated so the in/out alias inside
# the pallas_call can actually reuse the buffer (no defensive copy).  Callers
# must NOT reuse `x` after the call.
identity_mapping = jax.jit(_identity_mapping_impl, donate_argnums=0)


if __name__ == "__main__":
    warnings.filterwarnings("ignore", message=".*[Dd]onat.*")

    key = jax.random.PRNGKey(0)
    x = jax.random.normal(key, (2, 4, 16, 16), dtype=jnp.float32)  # NCHW
    # Host copy for the check BEFORE calling: x is donated to the kernel.
    x_host = np.asarray(x)

    y = identity_mapping(x)
    jax.block_until_ready(y)

    # Forward semantics: base = Identity => output == input exactly.
    assert y.shape == x_host.shape and y.dtype == x_host.dtype
    assert np.array_equal(np.asarray(y), x_host)

    print("KERNEL_OK")
</pallas_src>

<mosaic_0001>
module attributes {stable_mosaic.version = 11 : i64} {
  func.func @_copy_kernel(%arg0: i32, %arg1: memref<1x2048xf32, #tpu.memory_space<vmem>>, %arg2: memref<1x2048xf32, #tpu.memory_space<vmem>>) attributes {dimension_semantics = [#tpu.dimension_semantics<parallel>], iteration_bounds = array<i64: 1>, scalar_prefetch = 0 : i64, scratch_operands = 0 : i64, tpu.core_type = #tpu.core_type<tc>, window_params = [{transform_indices = @transform_0, window_bounds = array<i64: 1, 2048>}, {transform_indices = @transform_1, window_bounds = array<i64: 1, 2048>}]} {
    %c0 = arith.constant 0 : index
    %c0_0 = arith.constant 0 : index
    %0 = vector.load %arg1[%c0, %c0_0] : memref<1x2048xf32, #tpu.memory_space<vmem>>, vector<1x2048xf32>
    %c0_1 = arith.constant 0 : index
    %c0_2 = arith.constant 0 : index
    %1 = vector.load %arg2[%c0_1, %c0_2] : memref<1x2048xf32, #tpu.memory_space<vmem>>, vector<1x2048xf32>
    tpu.vector_store %arg2[%c0_1, %c0_2], %0 {strides = array<i32>} : memref<1x2048xf32, #tpu.memory_space<vmem>>, vector<1x2048xf32>,
    return
  }
  func.func @transform_0(%arg0: i32) -> (i32, i32) {
    %c0_i32 = arith.constant 0 : i32
    %c0_i32_0 = arith.constant 0 : i32
    return %arg0, %c0_i32 : i32, i32
  }
  func.func @transform_1(%arg0: i32) -> (i32, i32) {
    %c0_i32 = arith.constant 0 : i32
    %c0_i32_0 = arith.constant 0 : i32
    return %arg0, %c0_i32 : i32, i32
  }
}

</mosaic_0001>

<llo_original>
// kernel: _identity_mapping_impl.1
$region0: #{_identity_mapping_impl.1}
  #allocation0 [shape = 'u32[]', space=smem, size = 0x4, offset = 0x4, fixed_abs, tag = 'smem constant byte address 0x4 - core index']
  #allocation1 [shape = 'u32[72,128]{1,0:T(1,128)}', space=vmem, size = 0x9000, scoped, tag = 'internal scratch']
  %s0 = inlined_call_operand.vmem [shape: f32[1,2048], index: 0, kind: input, shape index: {}, may-alias: {0,1}]
  %s1 = inlined_call_operand.vmem [shape: f32[1,2048], index: 1, kind: output, shape index: {}, may-alias: {0,1}]
  %s2 = sld [smem:[#allocation0]]
  $region14: #{_identity_mapping_impl.1} parent=0
    _
  %s4 = ssub.s32 1, %s2
  %s5 = scalar_select 0, %s4, %s2
  // Predicated region
  $region2: #{_identity_mapping_impl.1} parent=0 // pred_check
    _
  $region3: #{_identity_mapping_impl.1} parent=0 // pred_check_branch
    %7 = sbr.rel (0) target = $region5
  $region4: #{_identity_mapping_impl.1} parent=0 // pred_region
    _
  $region5: #{_identity_mapping_impl.1} parent=0 // pred_fallthru
    _
  %v8 = vld [vmem:[%s0] sm:$0xff]
  %v9 = vld [vmem:[%s0 + $0x8] sm:$0xff]
  %10 = vst [vmem:[%s1] sm:$0xff] %v8
  %11 = vst [vmem:[%s1 + $0x8] sm:$0xff] %v9
  // Predicated region
  $region6: #{_identity_mapping_impl.1} parent=0 // pred_check
    _
  $region7: #{_identity_mapping_impl.1} parent=0 // pred_check_branch
    %13 = sbr.rel (0) target = $region9
  $region8: #{_identity_mapping_impl.1} parent=0 // pred_region
    _
  $region9: #{_identity_mapping_impl.1} parent=0 // pred_fallthru
    _
  // Predicated region
  $region10: #{_identity_mapping_impl.1} parent=0 // pred_check
    _
  $region11: #{_identity_mapping_impl.1} parent=0 // pred_check_branch
    %15 = sbr.rel (0) target = $region13
  $region12: #{_identity_mapping_impl.1} parent=0 // pred_region
    _
  $region13: #{_identity_mapping_impl.1} parent=0 // pred_fallthru
    _

</llo_original>
